<compile_context>
chip_gen: v7x
topology: tpu7x:2x2x1
jax: 0.10.0
libtpu: 0.0.40
codegen_flags: <defaults>
</compile_context>

<pallas_src>
import jax
import jax.numpy as jnp
from jax.experimental import pallas as pl
from jax.experimental.pallas import tpu as pltpu

H1 = 64     # first hidden width (fixed by the module)
H2 = 128    # second hidden width (fixed by the module)
MAX_TM = 1024  # max batch-tile rows; with true-width tiles this is far under
               # the 32 MiB scoped-VMEM default (and v7x's 64 MiB physical VMEM)


def _round_up(x, m):
    return ((x + m - 1) // m) * m


def _cdiv(a, b):
    return -(-a // b)


def _mlp_kernel(x_ref, w1_ref, b1_ref, w2_ref, b2_ref, w3_ref, b3_ref, o_ref):
    # Three matmuls on the MXU (f32 accumulation), bias + ReLU on the VPU.
    x = x_ref[...]
    h1 = jnp.dot(x, w1_ref[...], preferred_element_type=jnp.float32) + b1_ref[...]
    h1 = jnp.maximum(h1, 0.0)
    h2 = jnp.dot(h1, w2_ref[...], preferred_element_type=jnp.float32) + b2_ref[...]
    h2 = jnp.maximum(h2, 0.0)
    y = jnp.dot(h2, w3_ref[...], preferred_element_type=jnp.float32) + b3_ref[...]
    o_ref[...] = y.astype(o_ref.dtype)


def _choose_tile(batch):
    """Batch-tile rows: multiple of 8, <= MAX_TM, >= 2 tiles when batch >= 16
    (so both v7x TensorCores get work), and padding waste < one tile."""
    rb = _round_up(batch, 8)
    if batch < 16:
        return rb                       # single tiny tile; nothing to split
    n_tiles = max(2, _cdiv(rb, MAX_TM)) # at least 2 tiles for megacore
    return _round_up(_cdiv(rb, n_tiles), 8)


def net_forward(x, params):
    """Pallas implementation of Net.forward.  params = (w1,b1,w2,b2,w3,b3)
    with w_i of shape (fan_in, fan_out) and b_i of shape (1, fan_out)."""
    w1, b1, w2, b2, w3, b3 = params
    batch, in_feature = x.shape
    out_feature = w3.shape[1]

    tm = _choose_tile(batch)
    batch_p = _round_up(batch, tm)
    xp = jnp.pad(x, ((0, batch_p - batch), (0, 0))) if batch_p != batch else x

    grid = (batch_p // tm,)

    flops = 2 * batch_p * (in_feature * H1 + H1 * H2 + H2 * out_feature)
    bytes_accessed = (xp.size * 4 + batch_p * out_feature * 4
                      + sum(int(p.size) for p in params) * 4)

    out = pl.pallas_call(
        _mlp_kernel,
        out_shape=jax.ShapeDtypeStruct((batch_p, out_feature), jnp.float32),
        grid_spec=pltpu.PrefetchScalarGridSpec(
            num_scalar_prefetch=0,
            grid=grid,
            in_specs=[
                pl.BlockSpec((tm, in_feature), lambda i: (i, 0)),   # x tile (pipelined)
                pl.BlockSpec((in_feature, H1), lambda i: (0, 0)),   # W1 (VMEM-resident)
                pl.BlockSpec((1, H1), lambda i: (0, 0)),            # b1
                pl.BlockSpec((H1, H2), lambda i: (0, 0)),           # W2
                pl.BlockSpec((1, H2), lambda i: (0, 0)),            # b2
                pl.BlockSpec((H2, out_feature), lambda i: (0, 0)),  # W3
                pl.BlockSpec((1, out_feature), lambda i: (0, 0)),   # b3
            ],
            out_specs=pl.BlockSpec((tm, out_feature), lambda i: (i, 0)),
        ),
        compiler_params=pltpu.CompilerParams(
            # Batch tiles are independent -> shard across TensorCores on v7x.
            dimension_semantics=("parallel",),
        ),
        cost_estimate=pl.CostEstimate(
            flops=flops, transcendentals=0, bytes_accessed=bytes_accessed),
    )(xp, w1, b1, w2, b2, w3, b3)

    # Only slice if the batch was actually padded (no-op otherwise).
    return out[:batch] if batch_p != batch else out


def init_params(key, in_feature, out_feature):
    """Deterministic init mimicking torch.nn.Linear default U[-1/sqrt(fan_in), +1/sqrt(fan_in)]."""
    dims = [(in_feature, 64), (64, 128), (128, out_feature)]
    params = []
    for (fan_in, fan_out) in dims:
        key, kw, kb = jax.random.split(key, 3)
        bound = 1.0 / jnp.sqrt(fan_in)
        w = jax.random.uniform(kw, (fan_in, fan_out), jnp.float32, -bound, bound)
        b = jax.random.uniform(kb, (1, fan_out), jnp.float32, -bound, bound)
        params += [w, b]
    return tuple(params)


def reference_forward(x, params):
    w1, b1, w2, b2, w3, b3 = params
    h1 = jnp.maximum(x @ w1 + b1, 0.0)
    h2 = jnp.maximum(h1 @ w2 + b2, 0.0)
    return h2 @ w3 + b3


if __name__ == "__main__":
    in_feature, out_feature = 32, 16
    batch = 8

    key = jax.random.PRNGKey(0)
    key, kx = jax.random.split(key)
    x = jax.random.normal(kx, (batch, in_feature), jnp.float32)
    params = init_params(key, in_feature, out_feature)

    out = net_forward(x, params)
    out = jax.block_until_ready(out)

    ref = reference_forward(x, params)
    assert out.shape == (batch, out_feature), out.shape
    # f32 weights/activations; tolerance covers TPU default-precision matmuls.
    assert jnp.allclose(out, ref, atol=2e-2, rtol=2e-2), jnp.max(jnp.abs(out - ref))

    print("KERNEL_OK")
</pallas_src>

<mosaic_0001>
module attributes {stable_mosaic.version = 11 : i64} {
  func.func @_mlp_kernel(%arg0: i32, %arg1: memref<8x32xf32, #tpu.memory_space<vmem>>, %arg2: memref<32x64xf32, #tpu.memory_space<vmem>>, %arg3: memref<1x64xf32, #tpu.memory_space<vmem>>, %arg4: memref<64x128xf32, #tpu.memory_space<vmem>>, %arg5: memref<1x128xf32, #tpu.memory_space<vmem>>, %arg6: memref<128x16xf32, #tpu.memory_space<vmem>>, %arg7: memref<1x16xf32, #tpu.memory_space<vmem>>, %arg8: memref<8x16xf32, #tpu.memory_space<vmem>>) attributes {dimension_semantics = [#tpu.dimension_semantics<parallel>], iteration_bounds = array<i64: 1>, scalar_prefetch = 0 : i64, scratch_operands = 0 : i64, tpu.core_type = #tpu.core_type<tc>, window_params = [{transform_indices = @transform_0, window_bounds = array<i64: 8, 32>}, {pipeline_mode = #tpu.pipeline_mode<synchronous>, transform_indices = @transform_1, window_bounds = array<i64: 32, 64>}, {pipeline_mode = #tpu.pipeline_mode<synchronous>, transform_indices = @transform_2, window_bounds = array<i64: 1, 64>}, {pipeline_mode = #tpu.pipeline_mode<synchronous>, transform_indices = @transform_3, window_bounds = array<i64: 64, 128>}, {pipeline_mode = #tpu.pipeline_mode<synchronous>, transform_indices = @transform_4, window_bounds = array<i64: 1, 128>}, {pipeline_mode = #tpu.pipeline_mode<synchronous>, transform_indices = @transform_5, window_bounds = array<i64: 128, 16>}, {pipeline_mode = #tpu.pipeline_mode<synchronous>, transform_indices = @transform_6, window_bounds = array<i64: 1, 16>}, {transform_indices = @transform_7, window_bounds = array<i64: 8, 16>}]} {
    %c0 = arith.constant 0 : index
    %c0_0 = arith.constant 0 : index
    %0 = vector.load %arg1[%c0, %c0_0] : memref<8x32xf32, #tpu.memory_space<vmem>>, vector<8x32xf32>
    %c0_1 = arith.constant 0 : index
    %c0_2 = arith.constant 0 : index
    %1 = vector.load %arg2[%c0_1, %c0_2] : memref<32x64xf32, #tpu.memory_space<vmem>>, vector<32x64xf32>
    %cst = arith.constant dense<0.000000e+00> : vector<8x64xf32>
    %2 = tpu.matmul %0, %1, %cst {dimension_numbers = #tpu.dot_dimension_numbers<[1], [0], [0], [1], [0, 0, 1, 1], [], []>} : vector<8x32xf32>, vector<32x64xf32>, vector<8x64xf32> -> vector<8x64xf32>
    %c0_3 = arith.constant 0 : index
    %c0_4 = arith.constant 0 : index
    %3 = vector.load %arg3[%c0_3, %c0_4] : memref<1x64xf32, #tpu.memory_space<vmem>>, vector<1x64xf32>
    %4 = vector.broadcast %3 : vector<1x64xf32> to vector<8x64xf32>
    %5 = arith.addf %2, %4 : vector<8x64xf32>
    %cst_5 = arith.constant 0.000000e+00 : f32
    %6 = vector.broadcast %cst_5 : f32 to vector<8x64xf32>
    %7 = arith.maximumf %5, %6 : vector<8x64xf32>
    %c0_6 = arith.constant 0 : index
    %c0_7 = arith.constant 0 : index
    %8 = vector.load %arg4[%c0_6, %c0_7] : memref<64x128xf32, #tpu.memory_space<vmem>>, vector<64x128xf32>
    %cst_8 = arith.constant dense<0.000000e+00> : vector<8x128xf32>
    %9 = tpu.matmul %7, %8, %cst_8 {dimension_numbers = #tpu.dot_dimension_numbers<[1], [0], [0], [1], [0, 0, 1, 1], [], []>} : vector<8x64xf32>, vector<64x128xf32>, vector<8x128xf32> -> vector<8x128xf32>
    %c0_9 = arith.constant 0 : index
    %c0_10 = arith.constant 0 : index
    %10 = vector.load %arg5[%c0_9, %c0_10] : memref<1x128xf32, #tpu.memory_space<vmem>>, vector<1x128xf32>
    %11 = vector.broadcast %10 : vector<1x128xf32> to vector<8x128xf32>
    %12 = arith.addf %9, %11 : vector<8x128xf32>
    %cst_11 = arith.constant 0.000000e+00 : f32
    %13 = vector.broadcast %cst_11 : f32 to vector<8x128xf32>
    %14 = arith.maximumf %12, %13 : vector<8x128xf32>
    %c0_12 = arith.constant 0 : index
    %c0_13 = arith.constant 0 : index
    %15 = vector.load %arg6[%c0_12, %c0_13] : memref<128x16xf32, #tpu.memory_space<vmem>>, vector<128x16xf32>
    %cst_14 = arith.constant dense<0.000000e+00> : vector<8x16xf32>
    %16 = tpu.matmul %14, %15, %cst_14 {dimension_numbers = #tpu.dot_dimension_numbers<[1], [0], [0], [1], [0, 0, 1, 1], [], []>} : vector<8x128xf32>, vector<128x16xf32>, vector<8x16xf32> -> vector<8x16xf32>
    %c0_15 = arith.constant 0 : index
    %c0_16 = arith.constant 0 : index
    %17 = vector.load %arg7[%c0_15, %c0_16] : memref<1x16xf32, #tpu.memory_space<vmem>>, vector<1x16xf32>
    %18 = vector.broadcast %17 : vector<1x16xf32> to vector<8x16xf32>
    %19 = arith.addf %16, %18 : vector<8x16xf32>
    %c0_17 = arith.constant 0 : index
    %c0_18 = arith.constant 0 : index
    %20 = vector.load %arg8[%c0_17, %c0_18] : memref<8x16xf32, #tpu.memory_space<vmem>>, vector<8x16xf32>
    tpu.vector_store %arg8[%c0_17, %c0_18], %19 {strides = array<i32>} : memref<8x16xf32, #tpu.memory_space<vmem>>, vector<8x16xf32>,
    return
  }
  func.func @transform_0(%arg0: i32) -> (i32, i32) {
    %c0_i32 = arith.constant 0 : i32
    %c0_i32_0 = arith.constant 0 : i32
    return %arg0, %c0_i32 : i32, i32
  }
  func.func @transform_1(%arg0: i32) -> (i32, i32) {
    %c0_i32 = arith.constant 0 : i32
    %c0_i32_0 = arith.constant 0 : i32
    %c0_i32_1 = arith.constant 0 : i32
    return %c0_i32, %c0_i32_0 : i32, i32
  }
  func.func @transform_2(%arg0: i32) -> (i32, i32) {
    %c0_i32 = arith.constant 0 : i32
    %c0_i32_0 = arith.constant 0 : i32
    %c0_i32_1 = arith.constant 0 : i32
    return %c0_i32, %c0_i32_0 : i32, i32
  }
  func.func @transform_3(%arg0: i32) -> (i32, i32) {
    %c0_i32 = arith.constant 0 : i32
    %c0_i32_0 = arith.constant 0 : i32
    %c0_i32_1 = arith.constant 0 : i32
    return %c0_i32, %c0_i32_0 : i32, i32
  }
  func.func @transform_4(%arg0: i32) -> (i32, i32) {
    %c0_i32 = arith.constant 0 : i32
    %c0_i32_0 = arith.constant 0 : i32
    %c0_i32_1 = arith.constant 0 : i32
    return %c0_i32, %c0_i32_0 : i32, i32
  }
  func.func @transform_5(%arg0: i32) -> (i32, i32) {
    %c0_i32 = arith.constant 0 : i32
    %c0_i32_0 = arith.constant 0 : i32
    %c0_i32_1 = arith.constant 0 : i32
    return %c0_i32, %c0_i32_0 : i32, i32
  }
  func.func @transform_6(%arg0: i32) -> (i32, i32) {
    %c0_i32 = arith.constant 0 : i32
    %c0_i32_0 = arith.constant 0 : i32
    %c0_i32_1 = arith.constant 0 : i32
    return %c0_i32, %c0_i32_0 : i32, i32
  }
  func.func @transform_7(%arg0: i32) -> (i32, i32) {
    %c0_i32 = arith.constant 0 : i32
    %c0_i32_0 = arith.constant 0 : i32
    return %arg0, %c0_i32 : i32, i32
  }
}

</mosaic_0001>

<llo_original>
// kernel: tpu_custom_call.1
$region0: #{tpu_custom_call.1}
  #allocation0 [shape = 'u32[]', space=smem, size = 0x4, offset = 0x4, fixed_abs, tag = 'smem constant byte address 0x4 - core index']
  #allocation1 [shape = 'u32[144,128]{1,0:T(1,128)}', space=vmem, size = 0x12000, scoped, tag = 'internal scratch']
  %s0 = inlined_call_operand.vmem [shape: f32[8,32], index: 0, kind: input, shape index: {}]
  %s1 = inlined_call_operand.vmem [shape: f32[32,64], index: 1, kind: input, shape index: {}]
  %s2 = inlined_call_operand.vmem [shape: f32[1,64], index: 2, kind: input, shape index: {}]
  %s3 = inlined_call_operand.vmem [shape: f32[64,128], index: 3, kind: input, shape index: {}]
  %s4 = inlined_call_operand.vmem [shape: f32[1,128], index: 4, kind: input, shape index: {}]
  %s5 = inlined_call_operand.vmem [shape: f32[128,16], index: 5, kind: input, shape index: {}]
  %s6 = inlined_call_operand.vmem [shape: f32[1,16], index: 6, kind: input, shape index: {}]
  %s7 = inlined_call_operand.hbm [shape: f32[8,16], index: 7, kind: output, shape index: {}]
  %s8 = sld [smem:[#allocation0]]
  $region38: #{tpu_custom_call.1} parent=0
    _
  %s10 = ssub.s32 1, %s8
  %s11 = scalar_select 0, %s10, %s8
  $region1: #{tpu_custom_call.1} parent=0
    #allocation2 [shape = 'u8[4096]{0}', space=vmem, size = 0x1000, scoped, tag = 'output window, operand 0, single buffered']
    #allocation3 [shape = 's32[1]{0}', space=sflag, size = 0x4, scoped, tag = 'scoped memory for tpu_custom_call.1']
    %12 = vsyncpa [#allocation3], 0
    // Predicated region
    $region2: #{tpu_custom_call.1} parent=1 // pred_check
      _
    $region3: #{tpu_custom_call.1} parent=1 // pred_check_branch
      %14 = sbr.rel (0) target = $region5
    $region4: #{tpu_custom_call.1} parent=1 // pred_region
      _
    $region5: #{tpu_custom_call.1} parent=1 // pred_fallthru
      _
    // Predicated region
    $region6: #{tpu_custom_call.1} parent=1 // pred_check
      _
    $region7: #{tpu_custom_call.1} parent=1 // pred_check_branch
      %16 = sbr.rel (0) target = $region9
    $region8: #{tpu_custom_call.1} parent=1 // pred_region
      _
    $region9: #{tpu_custom_call.1} parent=1 // pred_fallthru
      _
    // Predicated region
    $region10: #{tpu_custom_call.1} parent=1 // pred_check
      _
    $region11: #{tpu_custom_call.1} parent=1 // pred_check_branch
      %18 = sbr.rel (0) target = $region13
    $region12: #{tpu_custom_call.1} parent=1 // pred_region
      _
    $region13: #{tpu_custom_call.1} parent=1 // pred_fallthru
      _
    // Predicated region
    $region14: #{tpu_custom_call.1} parent=1 // pred_check
      _
    $region15: #{tpu_custom_call.1} parent=1 // pred_check_branch
      %20 = sbr.rel (0) target = $region17
    $region16: #{tpu_custom_call.1} parent=1 // pred_region
      _
    $region17: #{tpu_custom_call.1} parent=1 // pred_fallthru
      _
    // Predicated region
    $region18: #{tpu_custom_call.1} parent=1 // pred_check
      _
    $region19: #{tpu_custom_call.1} parent=1 // pred_check_branch
      %22 = sbr.rel (0) target = $region21
    $region20: #{tpu_custom_call.1} parent=1 // pred_region
      _
    $region21: #{tpu_custom_call.1} parent=1 // pred_fallthru
      _
    // Predicated region
    $region22: #{tpu_custom_call.1} parent=1 // pred_check
      _
    $region23: #{tpu_custom_call.1} parent=1 // pred_check_branch
      %24 = sbr.rel (0) target = $region25
    $region24: #{tpu_custom_call.1} parent=1 // pred_region
      _
    $region25: #{tpu_custom_call.1} parent=1 // pred_fallthru
      _
    // Predicated region
    $region26: #{tpu_custom_call.1} parent=1 // pred_check
      _
    $region27: #{tpu_custom_call.1} parent=1 // pred_check_branch
      %26 = sbr.rel (0) target = $region29
    $region28: #{tpu_custom_call.1} parent=1 // pred_region
      _
    $region29: #{tpu_custom_call.1} parent=1 // pred_fallthru
      _
    %v27 = vld [vmem:[%s0] sm:$0xff]
    %v28 = vld [vmem:[%s1] sm:$0xff]
    %v29 = vld [vmem:[%s1 + $0x8] sm:$0xff]
    %v30 = vld [vmem:[%s1 + $0x10] sm:$0xff]
    %v31 = vld [vmem:[%s1 + $0x18] sm:$0xff]
    %v32 = vld [vmem:[%s2] sm:$0x1]
    %v34 = vlaneseq
    %v35 = vshrl.u32 %v34, 7
    %v36 = vsub.s32 0, %v35
    %v37 = vrot.slane %v32, %v36
    %vm39 = vcmask 261120
    %v41 = vsel %vm39, %v27, 0
    %43 = vmatprep.subr.mxu0 0.0
    %44 = vmatpush1.msra.mxu0 %v28
    %45 = vmatprep.subr.mxu0 0.0
    %46 = vmatpush1.msra.mxu0 %v29
    %47 = vmatprep.subr.mxu0 0.0
    %48 = vmatpush1.msra.mxu0 %v30
    %49 = vmatprep.subr.mxu0 0.0
    %50 = vmatpush1.msra.mxu0 %v31
    %51 = vmatprep.subr.mxu0 0.0
    %52 = vmatpush1.msra.mxu0 0.0
    %53 = vmatprep.subr.mxu0 0.0
    %54 = vmatpush1.msra.mxu0 0.0
    %55 = vmatprep.subr.mxu0 0.0
    %56 = vmatpush1.msra.mxu0 0.0
    %57 = vmatprep.subr.mxu0 0.0
    %58 = vmatpush1.msra.mxu0 0.0
    %59 = vmatprep.subr.mxu0 0.0
    %60 = vmatpush1.msra.mxu0 0.0
    %61 = vmatprep.subr.mxu0 0.0
    %62 = vmatpush1.msra.mxu0 0.0
    %63 = vmatprep.subr.mxu0 0.0
    %64 = vmatpush1.msra.mxu0 0.0
    %65 = vmatprep.subr.mxu0 0.0
    %66 = vmatpush1.msra.mxu0 0.0
    %67 = vmatprep.subr.mxu0 0.0
    %68 = vmatpush1.msra.mxu0 0.0
    %69 = vmatprep.subr.mxu0 0.0
    %70 = vmatpush1.msra.mxu0 0.0
    %71 = vmatprep.subr.mxu0 0.0
    %72 = vmatpush1.msra.mxu0 0.0
    %73 = vmatprep.subr.mxu0 0.0
    %74 = vmatpush1.msra.mxu0 0.0
    %75 = vmatprep.subr.mxu0 0.0
    %76 = vmatpush1.msra.mxu0 0.0
    %77 = vmatprep.subr.mxu0 0.0
    %78 = vmatpush1.msra.mxu0 0.0
    %79 = vmatprep.subr.mxu0 0.0
    %80 = vmatpush1.msra.mxu0 0.0
    %81 = vmatprep.subr.mxu0 0.0
    %82 = vmatpush1.msra.mxu0 0.0
    %83 = vmatprep.subr.mxu0 0.0
    %84 = vmatpush1.msra.mxu0 0.0
    %85 = vmatprep.subr.mxu0 0.0
    %86 = vmatpush1.msra.mxu0 0.0
    %87 = vmatprep.subr.mxu0 0.0
    %88 = vmatpush1.msra.mxu0 0.0
    %89 = vmatprep.subr.mxu0 0.0
    %90 = vmatpush1.msra.mxu0 0.0
    %91 = vmatprep.subr.mxu0 0.0
    %92 = vmatpush1.msra.mxu0 0.0
    %93 = vmatprep.subr.mxu0 0.0
    %94 = vmatpush1.msra.mxu0 0.0
    %95 = vmatprep.subr.mxu0 0.0
    %96 = vmatpush1.msra.mxu0 0.0
    %97 = vmatprep.subr.mxu0 0.0
    %98 = vmatpush1.msra.mxu0 0.0
    %99 = vmatprep.subr.mxu0 0.0
    %100 = vmatpush1.msra.mxu0 0.0
    %101 = vmatprep.subr.mxu0 0.0
    %102 = vmatpush1.msra.mxu0 0.0
    %103 = vmatprep.subr.mxu0 0.0
    %104 = vmatpush1.msra.mxu0 0.0
    %105 = vmatprep.subr.mxu0 0.0
    %106 = vmatpush1.msra.mxu0 0.0
    %107 = vmatprep.mubr.f32.mxu0 0.0
    %108 = vmatmul.mubr.f32.gmra.mrb[0].mxu0 %v41
    %v109 = vpop.f32.mrb[0].mxu0
    %v110 = vadd.f32 %v37, %v109
    %v111 = vpop.f32.mrb[0].mxu0
    %112 = vdwg.mxu0
    %v113 = vmax.f32 %v110, 0.0
    %v114 = vld [vmem:[%s3] sm:$0xff]
    %v115 = vld [vmem:[%s3 + $0x8] sm:$0xff]
    %v116 = vld [vmem:[%s3 + $0x10] sm:$0xff]
    %v117 = vld [vmem:[%s3 + $0x18] sm:$0xff]
    %v118 = vld [vmem:[%s3 + $0x20] sm:$0xff]
    %v119 = vld [vmem:[%s3 + $0x28] sm:$0xff]
    %v120 = vld [vmem:[%s3 + $0x30] sm:$0xff]
    %v121 = vld [vmem:[%s3 + $0x38] sm:$0xff]
    %v122 = vld [vmem:[%s4] sm:$0x1]
    %v124 = vlaneseq
    %v125 = vshrl.u32 %v124, 7
    %v126 = vsub.s32 0, %v125
    %v127 = vrot.slane %v122, %v126
    %vm129 = vcmask 523264
    %v131 = vsel %vm129, %v113, 0
    %133 = vmatprep.subr.mxu0 0.0
    %134 = vmatpush1.msra.mxu0 %v114
    %135 = vmatprep.subr.mxu0 0.0
    %136 = vmatpush1.msra.mxu0 %v115
    %137 = vmatprep.subr.mxu0 0.0
    %138 = vmatpush1.msra.mxu0 %v116
    %139 = vmatprep.subr.mxu0 0.0
    %140 = vmatpush1.msra.mxu0 %v117
    %141 = vmatprep.subr.mxu0 0.0
    %142 = vmatpush1.msra.mxu0 %v118
    %143 = vmatprep.subr.mxu0 0.0
    %144 = vmatpush1.msra.mxu0 %v119
    %145 = vmatprep.subr.mxu0 0.0
    %146 = vmatpush1.msra.mxu0 %v120
    %147 = vmatprep.subr.mxu0 0.0
    %148 = vmatpush1.msra.mxu0 %v121
    %149 = vmatprep.subr.mxu0 0.0
    %150 = vmatpush1.msra.mxu0 0.0
    %151 = vmatprep.subr.mxu0 0.0
    %152 = vmatpush1.msra.mxu0 0.0
    %153 = vmatprep.subr.mxu0 0.0
    %154 = vmatpush1.msra.mxu0 0.0
    %155 = vmatprep.subr.mxu0 0.0
    %156 = vmatpush1.msra.mxu0 0.0
    %157 = vmatprep.subr.mxu0 0.0
    %158 = vmatpush1.msra.mxu0 0.0
    %159 = vmatprep.subr.mxu0 0.0
    %160 = vmatpush1.msra.mxu0 0.0
    %161 = vmatprep.subr.mxu0 0.0
    %162 = vmatpush1.msra.mxu0 0.0
    %163 = vmatprep.subr.mxu0 0.0
    %164 = vmatpush1.msra.mxu0 0.0
    %165 = vmatprep.subr.mxu0 0.0
    %166 = vmatpush1.msra.mxu0 0.0
    %167 = vmatprep.subr.mxu0 0.0
    %168 = vmatpush1.msra.mxu0 0.0
    %169 = vmatprep.subr.mxu0 0.0
    %170 = vmatpush1.msra.mxu0 0.0
    %171 = vmatprep.subr.mxu0 0.0
    %172 = vmatpush1.msra.mxu0 0.0
    %173 = vmatprep.subr.mxu0 0.0
    %174 = vmatpush1.msra.mxu0 0.0
    %175 = vmatprep.subr.mxu0 0.0
    %176 = vmatpush1.msra.mxu0 0.0
    %177 = vmatprep.subr.mxu0 0.0
    %178 = vmatpush1.msra.mxu0 0.0
    %179 = vmatprep.subr.mxu0 0.0
    %180 = vmatpush1.msra.mxu0 0.0
    %181 = vmatprep.subr.mxu0 0.0
    %182 = vmatpush1.msra.mxu0 0.0
    %183 = vmatprep.subr.mxu0 0.0
    %184 = vmatpush1.msra.mxu0 0.0
    %185 = vmatprep.subr.mxu0 0.0
    %186 = vmatpush1.msra.mxu0 0.0
    %187 = vmatprep.subr.mxu0 0.0
    %188 = vmatpush1.msra.mxu0 0.0
    %189 = vmatprep.subr.mxu0 0.0
    %190 = vmatpush1.msra.mxu0 0.0
    %191 = vmatprep.subr.mxu0 0.0
    %192 = vmatpush1.msra.mxu0 0.0
    %193 = vmatprep.subr.mxu0 0.0
    %194 = vmatpush1.msra.mxu0 0.0
    %195 = vmatprep.subr.mxu0 0.0
    %196 = vmatpush1.msra.mxu0 0.0
    %197 = vmatprep.mubr.f32.mxu0 0.0
    %198 = vmatmul.mubr.f32.gmra.mrb[0].mxu0 %v131
    %v199 = vpop.f32.mrb[0].mxu0
    %v200 = vadd.f32 %v127, %v199
    %v201 = vpop.f32.mrb[0].mxu0
    %202 = vdwg.mxu0
    %v203 = vmax.f32 %v200, 0.0
    %v204 = vld [vmem:[%s5] sm:$0xff]
    %v205 = vld [vmem:[%s5 + $0x8] sm:$0xff]
    %v206 = vld [vmem:[%s5 + $0x10] sm:$0xff]
    %v207 = vld [vmem:[%s5 + $0x18] sm:$0xff]
    %v208 = vld [vmem:[%s5 + $0x20] sm:$0xff]
    %v209 = vld [vmem:[%s5 + $0x28] sm:$0xff]
    %v210 = vld [vmem:[%s5 + $0x30] sm:$0xff]
    %v211 = vld [vmem:[%s5 + $0x38] sm:$0xff]
    %v212 = vld [vmem:[%s5 + $0x40] sm:$0xff]
    %v213 = vld [vmem:[%s5 + $0x48] sm:$0xff]
    %v214 = vld [vmem:[%s5 + $0x50] sm:$0xff]
    %v215 = vld [vmem:[%s5 + $0x58] sm:$0xff]
    %v216 = vld [vmem:[%s5 + $0x60] sm:$0xff]
    %v217 = vld [vmem:[%s5 + $0x68] sm:$0xff]
    %v218 = vld [vmem:[%s5 + $0x70] sm:$0xff]
    %v219 = vld [vmem:[%s5 + $0x78] sm:$0xff]
    %v220 = vld [vmem:[%s6] sm:$0x1]
    %v222 = vlaneseq
    %v223 = vshrl.u32 %v222, 7
    %v224 = vsub.s32 0, %v223
    %v225 = vrot.slane %v220, %v224
    %227 = vmatprep.subr.mxu0 0.0
    %228 = vmatpush1.msra.mxu0 %v204
    %229 = vmatprep.subr.mxu0 0.0
    %230 = vmatpush1.msra.mxu0 %v205
    %231 = vmatprep.subr.mxu0 0.0
    %232 = vmatpush1.msra.mxu0 %v206
    %233 = vmatprep.subr.mxu0 0.0
    %234 = vmatpush1.msra.mxu0 %v207
    %235 = vmatprep.subr.mxu0 0.0
    %236 = vmatpush1.msra.mxu0 %v208
    %237 = vmatprep.subr.mxu0 0.0
    %238 = vmatpush1.msra.mxu0 %v209
    %239 = vmatprep.subr.mxu0 0.0
    %240 = vmatpush1.msra.mxu0 %v210
    %241 = vmatprep.subr.mxu0 0.0
    %242 = vmatpush1.msra.mxu0 %v211
    %243 = vmatprep.subr.mxu0 0.0
    %244 = vmatpush1.msra.mxu0 %v212
    %245 = vmatprep.subr.mxu0 0.0
    %246 = vmatpush1.msra.mxu0 %v213
    %247 = vmatprep.subr.mxu0 0.0
    %248 = vmatpush1.msra.mxu0 %v214
    %249 = vmatprep.subr.mxu0 0.0
    %250 = vmatpush1.msra.mxu0 %v215
    %251 = vmatprep.subr.mxu0 0.0
    %252 = vmatpush1.msra.mxu0 %v216
    %253 = vmatprep.subr.mxu0 0.0
    %254 = vmatpush1.msra.mxu0 %v217
    %255 = vmatprep.subr.mxu0 0.0
    %256 = vmatpush1.msra.mxu0 %v218
    %257 = vmatprep.subr.mxu0 0.0
    %258 = vmatpush1.msra.mxu0 %v219
    %259 = vmatprep.subr.mxu0 0.0
    %260 = vmatpush1.msra.mxu0 0.0
    %261 = vmatprep.subr.mxu0 0.0
    %262 = vmatpush1.msra.mxu0 0.0
    %263 = vmatprep.subr.mxu0 0.0
    %264 = vmatpush1.msra.mxu0 0.0
    %265 = vmatprep.subr.mxu0 0.0
    %266 = vmatpush1.msra.mxu0 0.0
    %267 = vmatprep.subr.mxu0 0.0
    %268 = vmatpush1.msra.mxu0 0.0
    %269 = vmatprep.subr.mxu0 0.0
    %270 = vmatpush1.msra.mxu0 0.0
    %271 = vmatprep.subr.mxu0 0.0
    %272 = vmatpush1.msra.mxu0 0.0
    %273 = vmatprep.subr.mxu0 0.0
    %274 = vmatpush1.msra.mxu0 0.0
    %275 = vmatprep.subr.mxu0 0.0
    %276 = vmatpush1.msra.mxu0 0.0
    %277 = vmatprep.subr.mxu0 0.0
    %278 = vmatpush1.msra.mxu0 0.0
    %279 = vmatprep.subr.mxu0 0.0
    %280 = vmatpush1.msra.mxu0 0.0
    %281 = vmatprep.subr.mxu0 0.0
    %282 = vmatpush1.msra.mxu0 0.0
    %283 = vmatprep.subr.mxu0 0.0
    %284 = vmatpush1.msra.mxu0 0.0
    %285 = vmatprep.subr.mxu0 0.0
    %286 = vmatpush1.msra.mxu0 0.0
    %287 = vmatprep.subr.mxu0 0.0
    %288 = vmatpush1.msra.mxu0 0.0
    %289 = vmatprep.subr.mxu0 0.0
    %290 = vmatpush1.msra.mxu0 0.0
    %291 = vmatprep.mubr.f32.mxu0 0.0
    %292 = vmatmul.mubr.f32.gmra.mrb[0].mxu0 %v203
    %v293 = vpop.f32.mrb[0].mxu0
    %v294 = vadd.f32 %v225, %v293
    %v295 = vpop.f32.mrb[0].mxu0
    %296 = vdwg.mxu0
    %vm297 = vcmask 130048
    %298 = vst.msk [vmem:[#allocation2] sm:$0xff] %vm297, %v294
    // Predicated region
    $region30: #{tpu_custom_call.1} parent=1 // pred_check
      _
    $region31: #{tpu_custom_call.1} parent=1 // pred_check_branch
      %300 = sbr.rel (0) target = $region33
    $region32: #{tpu_custom_call.1} parent=1 // pred_region
      %s302 = ssub.s32 128, 128
      %303 = vsyncadd [#allocation3], %s302
      %s305 = sshll.u32 [#allocation2], 4
      %s306 = int_to_ptr.vmem [resolvable:$true] %s305
      %308 = dma.vmem_to_hbm [thread:$0]  %s306, 128, %s7, [#allocation3]
    $region33: #{tpu_custom_call.1} parent=1 // pred_fallthru
      _
    // Predicated region
    $region34: #{tpu_custom_call.1} parent=1 // pred_check
      _
    $region35: #{tpu_custom_call.1} parent=1 // pred_check_branch
      %310 = sbr.rel (0) target = $region37
    $region36: #{tpu_custom_call.1} parent=1 // pred_region
      %311 = dma.done [#allocation3], 128
    $region37: #{tpu_custom_call.1} parent=1 // pred_fallthru
      _
    %312 = vsyncpa [#allocation3], 1

</llo_original>
